<compile_context>
chip_gen: v6e
topology: v6e:2x2x1
jax: 0.10.0
libtpu: 0.0.40
codegen_flags: <defaults>
</compile_context>

<pallas_src>
import functools

import jax
import jax.numpy as jnp
import numpy as np
from jax.experimental import pallas as pl
from jax.experimental.pallas import tpu as pltpu


def _round_up(x, m):
    return ((x + m - 1) // m) * m


# ----------------------------- GatedTrans kernel -----------------------------
def _gated_trans_kernel(x_ref, w_ref, b_ref, o_ref, *, H):
    # x_ref: (TN, Di), w_ref: (Di, 2H) = [Wy | Wg], b_ref: (1, 2H), o_ref: (TN, H)
    x = x_ref[...]
    yz = jnp.dot(x, w_ref[...], preferred_element_type=jnp.float32) + b_ref[...]
    y = jnp.tanh(yz[:, :H])
    g = jax.nn.sigmoid(yz[:, H:])
    o_ref[...] = (y * g).astype(o_ref.dtype)


def gated_trans(x, wy, by, wg, bg, *, row_tile=256):
    """GatedTrans: tanh(x@Wy+by) * sigmoid(x@Wg+bg), row-tiled over N."""
    N, Di = x.shape
    H = wy.shape[1]

    w_fused = jnp.concatenate([wy, wg], axis=1)   # (Di, 2H)
    b_fused = jnp.concatenate([by, bg], axis=1)   # (1, 2H)

    # Row tile: cap at `row_tile` (sized so f32 weights + double-buffered tiles fit
    # v7x's smaller scoped VMEM); small inputs use one (8-aligned) block.
    tn = row_tile if N >= row_tile else _round_up(N, 8)
    n_pad = _round_up(N, tn)
    if n_pad != N:
        x = jnp.pad(x, ((0, n_pad - N), (0, 0)))

    out = pl.pallas_call(
        functools.partial(_gated_trans_kernel, H=H),
        out_shape=jax.ShapeDtypeStruct((n_pad, H), jnp.float32),
        grid=(n_pad // tn,),
        in_specs=[
            pl.BlockSpec((tn, Di), lambda i: (i, 0)),
            pl.BlockSpec((Di, 2 * H), lambda i: (0, 0)),   # resident weights
            pl.BlockSpec((1, 2 * H), lambda i: (0, 0)),    # resident bias
        ],
        out_specs=pl.BlockSpec((tn, H), lambda i: (i, 0)),
        compiler_params=pltpu.CompilerParams(
            dimension_semantics=("parallel",),
            vmem_limit_bytes=48 * 1024 * 1024,
        ),
    )(x, w_fused, b_fused)
    return out[:N] if n_pad != N else out


# ----------------------------- Attention kernel ------------------------------
def _att_kernel(v_ref, q_ref, w_ref, b_ref, o_ref, *, num_proposals):
    # v_ref: (Bt, P_pad, H)   image GatedTrans embeddings (proposals padded to 128)
    # q_ref: (Bt, R,   H)     question GatedTrans embeddings
    # w_ref: (1, H)  att linear weight, b_ref: (1, 1) bias
    # o_ref: (Bt, R, P_pad)   softmax attention over proposals (padded cols -> 0)
    v = v_ref[...]
    q = q_ref[...]
    w = w_ref[...]                                  # (1, H) -> broadcasts over (Bt, R, H)
    b = b_ref[...]                                  # (1, 1) -> broadcasts over (Bt, R, P)

    # score[b,r,p] = (sum_h v*q*w) / max(||v*q||_2, 1e-12) + bias   (F.normalize semantics)
    num = jnp.einsum("brh,bph->brp", q * w, v, preferred_element_type=jnp.float32)
    sq = jnp.einsum("brh,bph->brp", q * q, v * v, preferred_element_type=jnp.float32)
    inv_norm = jax.lax.rsqrt(jnp.maximum(sq, 1e-24))          # == 1/max(sqrt(sq), 1e-12)
    scores = num * inv_norm + b                               # (Bt, R, P_pad)

    # Mask padded proposal columns, then softmax over the (lane-dense) last axis.
    col = jax.lax.broadcasted_iota(jnp.int32, scores.shape, dimension=2)
    scores = jnp.where(col < num_proposals, scores, -1e30)
    m = jnp.max(scores, axis=-1, keepdims=True)
    e = jnp.exp(scores - m)
    denom = jnp.sum(e, axis=-1, keepdims=True)
    o_ref[...] = (e * pl.reciprocal(denom)).astype(o_ref.dtype)


def att_module_forward(img, ques, params, *, batch_tile=8):
    B, P, Di = img.shape
    _, R, Dq = ques.shape
    H = params["v_wy"].shape[1]

    # V_embed / Q_embed (dropout is identity at inference)
    v_emb = gated_trans(
        img.reshape(B * P, Di),
        params["v_wy"], params["v_by"], params["v_wg"], params["v_bg"],
    ).reshape(B, P, H)
    q_emb = gated_trans(
        ques.reshape(B * R, Dq),
        params["q_wy"], params["q_by"], params["q_wg"], params["q_bg"],
    ).reshape(B, R, H)

    # Pad proposals to a lane-dense multiple of 128 and batch to a multiple of Bt.
    p_pad = _round_up(P, 128)
    bt = min(batch_tile, B)
    b_pad = _round_up(B, bt)
    if p_pad != P or b_pad != B:
        v_emb = jnp.pad(v_emb, ((0, b_pad - B), (0, p_pad - P), (0, 0)))
    if b_pad != B:
        q_emb = jnp.pad(q_emb, ((0, b_pad - B), (0, 0), (0, 0)))

    att = pl.pallas_call(
        functools.partial(_att_kernel, num_proposals=P),
        out_shape=jax.ShapeDtypeStruct((b_pad, R, p_pad), jnp.float32),
        grid=(b_pad // bt,),
        in_specs=[
            pl.BlockSpec((bt, p_pad, H), lambda i: (i, 0, 0)),
            pl.BlockSpec((bt, R, H), lambda i: (i, 0, 0)),
            pl.BlockSpec((1, H), lambda i: (0, 0)),
            pl.BlockSpec((1, 1), lambda i: (0, 0)),
        ],
        out_specs=pl.BlockSpec((bt, R, p_pad), lambda i: (i, 0, 0)),
        compiler_params=pltpu.CompilerParams(
            dimension_semantics=("parallel",),
            vmem_limit_bytes=48 * 1024 * 1024,
        ),
    )(v_emb, q_emb, params["att_w"], params["att_b"])
    return att[:B, :, :P]


# ----------------------------- reference (pure JAX) ---------------------------
def reference(img, ques, params):
    def gt(x, wy, by, wg, bg):
        return jnp.tanh(x @ wy + by) * jax.nn.sigmoid(x @ wg + bg)

    B, P, Di = img.shape
    _, R, Dq = ques.shape
    v = gt(img.reshape(-1, Di), params["v_wy"], params["v_by"],
           params["v_wg"], params["v_bg"]).reshape(B, P, -1)
    q = gt(ques.reshape(-1, Dq), params["q_wy"], params["q_by"],
           params["q_wg"], params["q_bg"]).reshape(B, R, -1)
    z = v[:, None, :, :] * q[:, :, None, :]                         # (B, R, P, H)
    zn = z / jnp.maximum(jnp.linalg.norm(z, axis=-1, keepdims=True), 1e-12)
    scores = jnp.einsum("brph,h->brp", zn, params["att_w"][0]) + params["att_b"][0, 0]
    return jax.nn.softmax(scores, axis=-1)


# ----------------------------- parameter init ---------------------------------
def kaiming_uniform(key, fan_in, shape):
    # matches nn.init.kaiming_uniform_ default (a=0 -> bound = sqrt(6/fan_in))
    bound = float(np.sqrt(6.0 / fan_in))
    return jax.random.uniform(key, shape, jnp.float32, -bound, bound)


if __name__ == "__main__":
    config = dict(img_feature_size=16, word_embedding_size=12,
                  lstm_hidden_size=32, dropout_fc=0.0)
    B, P, R = 2, 8, 3
    Di, Dq, H = (config["img_feature_size"], config["word_embedding_size"],
                 config["lstm_hidden_size"])

    key = jax.random.PRNGKey(0)
    keys = jax.random.split(key, 8)

    # weights stored as (in, out); PyTorch Linear biases are init'd to 0 in ATT_MODULE
    params = {
        "v_wy": kaiming_uniform(keys[0], Di, (Di, H)),
        "v_by": jnp.zeros((1, H), jnp.float32),
        "v_wg": kaiming_uniform(keys[1], Di, (Di, H)),
        "v_bg": jnp.zeros((1, H), jnp.float32),
        "q_wy": kaiming_uniform(keys[2], Dq, (Dq, H)),
        "q_by": jnp.zeros((1, H), jnp.float32),
        "q_wg": kaiming_uniform(keys[3], Dq, (Dq, H)),
        "q_bg": jnp.zeros((1, H), jnp.float32),
        "att_w": kaiming_uniform(keys[4], H, (1, H)),
        "att_b": jnp.zeros((1, 1), jnp.float32),
    }

    img = jax.random.normal(keys[5], (B, P, Di), jnp.float32)
    ques = jax.random.normal(keys[6], (B, R, Dq), jnp.float32)

    att = att_module_forward(img, ques, params)
    att = jax.block_until_ready(att)

    ref = reference(img, ques, params)
    assert att.shape == (B, R, P)
    np.testing.assert_allclose(np.asarray(att), np.asarray(ref), rtol=1e-5, atol=1e-5)
    print("KERNEL_OK")
</pallas_src>

<mosaic_0001>
module attributes {stable_mosaic.version = 11 : i64} {
  func.func @_gated_trans_kernel(%arg0: i32, %arg1: memref<16x16xf32, #tpu.memory_space<vmem>>, %arg2: memref<16x64xf32, #tpu.memory_space<vmem>>, %arg3: memref<1x64xf32, #tpu.memory_space<vmem>>, %arg4: memref<16x32xf32, #tpu.memory_space<vmem>>) attributes {dimension_semantics = [#tpu.dimension_semantics<parallel>], iteration_bounds = array<i64: 1>, scalar_prefetch = 0 : i64, scratch_operands = 0 : i64, tpu.core_type = #tpu.core_type<tc>, window_params = [{transform_indices = @transform_0, window_bounds = array<i64: 16, 16>}, {pipeline_mode = #tpu.pipeline_mode<synchronous>, transform_indices = @transform_1, window_bounds = array<i64: 16, 64>}, {pipeline_mode = #tpu.pipeline_mode<synchronous>, transform_indices = @transform_2, window_bounds = array<i64: 1, 64>}, {transform_indices = @transform_3, window_bounds = array<i64: 16, 32>}]} {
    %c0 = arith.constant 0 : index
    %c0_0 = arith.constant 0 : index
    %0 = vector.load %arg1[%c0, %c0_0] : memref<16x16xf32, #tpu.memory_space<vmem>>, vector<16x16xf32>
    %c0_1 = arith.constant 0 : index
    %c0_2 = arith.constant 0 : index
    %1 = vector.load %arg2[%c0_1, %c0_2] : memref<16x64xf32, #tpu.memory_space<vmem>>, vector<16x64xf32>
    %cst = arith.constant dense<0.000000e+00> : vector<16x64xf32>
    %2 = tpu.matmul %0, %1, %cst {dimension_numbers = #tpu.dot_dimension_numbers<[1], [0], [0], [1], [0, 0, 1, 1], [], []>} : vector<16x16xf32>, vector<16x64xf32>, vector<16x64xf32> -> vector<16x64xf32>
    %c0_3 = arith.constant 0 : index
    %c0_4 = arith.constant 0 : index
    %3 = vector.load %arg3[%c0_3, %c0_4] : memref<1x64xf32, #tpu.memory_space<vmem>>, vector<1x64xf32>
    %4 = vector.broadcast %3 : vector<1x64xf32> to vector<16x64xf32>
    %5 = arith.addf %2, %4 : vector<16x64xf32>
    %6 = vector.extract_strided_slice %5 {offsets = [0, 0], sizes = [16, 32], strides = [1, 1]} : vector<16x64xf32> to vector<16x32xf32>
    %7 = math.tanh %6 : vector<16x32xf32>
    %8 = vector.extract_strided_slice %5 {offsets = [0, 32], sizes = [16, 32], strides = [1, 1]} : vector<16x64xf32> to vector<16x32xf32>
    %9 = arith.negf %8 : vector<16x32xf32>
    %10 = math.exp %9 : vector<16x32xf32>
    %cst_5 = arith.constant 1.000000e+00 : f32
    %11 = vector.broadcast %cst_5 : f32 to vector<16x32xf32>
    %12 = arith.addf %11, %10 : vector<16x32xf32>
    %13 = arith.divf %11, %12 : vector<16x32xf32>
    %14 = arith.mulf %7, %13 : vector<16x32xf32>
    %c0_6 = arith.constant 0 : index
    %c0_7 = arith.constant 0 : index
    %15 = vector.load %arg4[%c0_6, %c0_7] : memref<16x32xf32, #tpu.memory_space<vmem>>, vector<16x32xf32>
    tpu.vector_store %arg4[%c0_6, %c0_7], %14 {strides = array<i32>} : memref<16x32xf32, #tpu.memory_space<vmem>>, vector<16x32xf32>,
    return
  }
  func.func @transform_0(%arg0: i32) -> (i32, i32) {
    %c0_i32 = arith.constant 0 : i32
    %c0_i32_0 = arith.constant 0 : i32
    return %arg0, %c0_i32 : i32, i32
  }
  func.func @transform_1(%arg0: i32) -> (i32, i32) {
    %c0_i32 = arith.constant 0 : i32
    %c0_i32_0 = arith.constant 0 : i32
    %c0_i32_1 = arith.constant 0 : i32
    return %c0_i32, %c0_i32_0 : i32, i32
  }
  func.func @transform_2(%arg0: i32) -> (i32, i32) {
    %c0_i32 = arith.constant 0 : i32
    %c0_i32_0 = arith.constant 0 : i32
    %c0_i32_1 = arith.constant 0 : i32
    return %c0_i32, %c0_i32_0 : i32, i32
  }
  func.func @transform_3(%arg0: i32) -> (i32, i32) {
    %c0_i32 = arith.constant 0 : i32
    %c0_i32_0 = arith.constant 0 : i32
    return %arg0, %c0_i32 : i32, i32
  }
}

</mosaic_0001>

<llo_original>
// kernel: tpu_custom_call.1
$region0: #{tpu_custom_call.1}
  #allocation0 [shape = 'u32[]', space=smem, size = 0x4, offset = 0x4, fixed_abs, tag = 'smem constant byte address 0x4 - core index']
  #allocation1 [shape = 'u32[144,128]{1,0:T(1,128)}', space=vmem, size = 0x12000, scoped, tag = 'internal scratch']
  %s0 = inlined_call_operand.hbm [shape: f32[16,16], index: 0, kind: input, shape index: {}]
  %s1 = inlined_call_operand.hbm [shape: f32[16,64], index: 1, kind: input, shape index: {}]
  %s2 = inlined_call_operand.vmem [shape: f32[1,64], index: 2, kind: input, shape index: {}]
  %s3 = inlined_call_operand.hbm [shape: f32[16,32], index: 3, kind: output, shape index: {}]
  %s4 = sld [smem:[#allocation0]]
  $region30: #{tpu_custom_call.1} parent=0
    _
  %s6 = ssub.s32 1, %s4
  %s7 = scalar_select 0, %s6, %s4
  $region1: #{tpu_custom_call.1} parent=0
    #allocation2 [shape = 'u8[8192]{0}', space=vmem, size = 0x2000, scoped, tag = 'input window, operand 0, single buffered']
    #allocation3 [shape = 's32[1]{0}', space=sflag, size = 0x4, scoped, tag = 'scoped memory for tpu_custom_call.1']
    #allocation4 [shape = 's32[1]{0}', space=sflag, size = 0x4, scoped, tag = 'scoped memory for tpu_custom_call.1']
    #allocation5 [shape = 'u8[8192]{0}', space=vmem, size = 0x2000, scoped, tag = 'input window, operand 1, single buffered']
    #allocation6 [shape = 's32[1]{0}', space=sflag, size = 0x4, scoped, tag = 'scoped memory for tpu_custom_call.1']
    #allocation7 [shape = 'u8[8192]{0}', space=vmem, size = 0x2000, scoped, tag = 'output window, operand 0, single buffered']
    %8 = vsyncpa [#allocation3], 0
    %9 = vsyncpa [#allocation6], 0
    %10 = vsyncpa [#allocation4], 0
    // Predicated region
    $region2: #{tpu_custom_call.1} parent=1 // pred_check
      _
    $region3: #{tpu_custom_call.1} parent=1 // pred_check_branch
      %12 = sbr.rel (0) target = $region5
    $region4: #{tpu_custom_call.1} parent=1 // pred_region
      %s14 = ssub.s32 256, 256
      %15 = vsyncadd [#allocation3], %s14
      %s16 = sshll.u32 [#allocation2], 4
      %s17 = int_to_ptr.vmem [resolvable:$true] %s16
      %22 = dma.hbm_to_vmem [thread:$0]  %s0, 256, %s17, [#allocation3], 128, 128, 8
    $region5: #{tpu_custom_call.1} parent=1 // pred_fallthru
      _
    // Predicated region
    $region6: #{tpu_custom_call.1} parent=1 // pred_check
      _
    $region7: #{tpu_custom_call.1} parent=1 // pred_check_branch
      %24 = sbr.rel (0) target = $region9
    $region8: #{tpu_custom_call.1} parent=1 // pred_region
      %s26 = ssub.s32 256, 256
      %27 = vsyncadd [#allocation6], %s26
      %s28 = sshll.u32 [#allocation5], 4
      %s29 = int_to_ptr.vmem [resolvable:$true] %s28
      %34 = dma.hbm_to_vmem [thread:$0]  %s1, 256, %s29, [#allocation6], 128, 128, 8
    $region9: #{tpu_custom_call.1} parent=1 // pred_fallthru
      _
    // Predicated region
    $region10: #{tpu_custom_call.1} parent=1 // pred_check
      _
    $region11: #{tpu_custom_call.1} parent=1 // pred_check_branch
      %36 = sbr.rel (0) target = $region13
    $region12: #{tpu_custom_call.1} parent=1 // pred_region
      _
    $region13: #{tpu_custom_call.1} parent=1 // pred_fallthru
      _
    // Predicated region
    $region14: #{tpu_custom_call.1} parent=1 // pred_check
      _
    $region15: #{tpu_custom_call.1} parent=1 // pred_check_branch
      %38 = sbr.rel (0) target = $region17
    $region16: #{tpu_custom_call.1} parent=1 // pred_region
      %39 = dma.done [#allocation3], 256
    $region17: #{tpu_custom_call.1} parent=1 // pred_fallthru
      _
    // Predicated region
    $region18: #{tpu_custom_call.1} parent=1 // pred_check
      _
    $region19: #{tpu_custom_call.1} parent=1 // pred_check_branch
      %41 = sbr.rel (0) target = $region21
    $region20: #{tpu_custom_call.1} parent=1 // pred_region
      %42 = dma.done [#allocation6], 256
    $region21: #{tpu_custom_call.1} parent=1 // pred_fallthru
      _
    %v43 = vld [vmem:[#allocation2] sm:$0xff]
    %v44 = vld [vmem:[#allocation2 + $0x8] sm:$0xff]
    %v45 = vld [vmem:[#allocation5] sm:$0xff]
    %v46 = vld [vmem:[#allocation5 + $0x8] sm:$0xff]
    %v47 = vld [vmem:[%s2] sm:$0x1]
    %v49 = vlaneseq
    %v50 = vshrl.u32 %v49, 7
    %v51 = vsub.s32 0, %v50
    %v52 = vrot.slane %v47, %v51
    %vm54 = vcmask 130048
    %v56 = vsel %vm54, %v43, 0
    %v59 = vsel %vm54, %v44, 0
    %61 = vmatprep.subr.mxu0 0.0
    %62 = vmatpush1.msra.mxu0 0.0
    %63 = vmatprep.subr.mxu0 0.0
    %64 = vmatpush1.msra.mxu0 0.0
    %65 = vmatprep.subr.mxu0 0.0
    %66 = vmatpush1.msra.mxu0 0.0
    %67 = vmatprep.subr.mxu0 0.0
    %68 = vmatpush1.msra.mxu0 0.0
    %69 = vmatprep.subr.mxu0 0.0
    %70 = vmatpush1.msra.mxu0 0.0
    %71 = vmatprep.subr.mxu0 0.0
    %72 = vmatpush1.msra.mxu0 0.0
    %73 = vmatprep.subr.mxu0 0.0
    %74 = vmatpush1.msra.mxu0 0.0
    %75 = vmatprep.subr.mxu0 0.0
    %76 = vmatpush1.msra.mxu0 0.0
    %77 = vmatprep.subr.mxu0 0.0
    %78 = vmatpush1.msra.mxu0 0.0
    %79 = vmatprep.subr.mxu0 0.0
    %80 = vmatpush1.msra.mxu0 0.0
    %81 = vmatprep.subr.mxu0 0.0
    %82 = vmatpush1.msra.mxu0 0.0
    %83 = vmatprep.subr.mxu0 0.0
    %84 = vmatpush1.msra.mxu0 0.0
    %85 = vmatprep.subr.mxu0 0.0
    %86 = vmatpush1.msra.mxu0 0.0
    %87 = vmatprep.subr.mxu0 0.0
    %88 = vmatpush1.msra.mxu0 0.0
    %89 = vmatprep.subr.mxu0 0.0
    %90 = vmatpush1.msra.mxu0 %v46
    %91 = vmatprep.subr.mxu0 0.0
    %92 = vmatpush1.msra.mxu0 %v45
    %93 = vmatprep.subr.mxu0 0.0
    %94 = vmatpush2.msra.mxu0 0.0
    %95 = vmatprep.subr.mxu0 0.0
    %96 = vmatpush2.msra.mxu0 0.0
    %97 = vmatprep.subr.mxu0 0.0
    %98 = vmatpush2.msra.mxu0 0.0
    %99 = vmatprep.subr.mxu0 0.0
    %100 = vmatpush2.msra.mxu0 0.0
    %101 = vmatprep.subr.mxu0 0.0
    %102 = vmatpush2.msra.mxu0 0.0
    %103 = vmatprep.subr.mxu0 0.0
    %104 = vmatpush2.msra.mxu0 0.0
    %105 = vmatprep.subr.mxu0 0.0
    %106 = vmatpush2.msra.mxu0 0.0
    %107 = vmatprep.subr.mxu0 0.0
    %108 = vmatpush2.msra.mxu0 0.0
    %109 = vmatprep.subr.mxu0 0.0
    %110 = vmatpush2.msra.mxu0 0.0
    %111 = vmatprep.subr.mxu0 0.0
    %112 = vmatpush2.msra.mxu0 0.0
    %113 = vmatprep.subr.mxu0 0.0
    %114 = vmatpush2.msra.mxu0 0.0
    %115 = vmatprep.subr.mxu0 0.0
    %116 = vmatpush2.msra.mxu0 0.0
    %117 = vmatprep.subr.mxu0 0.0
    %118 = vmatpush2.msra.mxu0 0.0
    %119 = vmatprep.subr.mxu0 0.0
    %120 = vmatpush2.msra.mxu0 0.0
    %121 = vmatprep.subr.mxu0 0.0
    %122 = vmatpush2.msra.mxu0 0.0
    %123 = vmatprep.subr.mxu0 0.0
    %124 = vmatpush2.msra.mxu0 0.0
    %125 = vmatprep.mubr.f32.mxu0 0.0
    %126 = vmatmul.mubr.f32.gmra.mxu0 %v56
    %v127 = vpop.f32.mrf.mxu0
    %v128 = vadd.f32 %v52, %v127
    %v129 = vpop.f32.mrf.mxu0
    %130 = vmatprep.mubr.f32.mxu0 0.0
    %131 = vmatmul.mubr.f32.gmra.mxu0 %v59
    %v132 = vpop.f32.mrf.mxu0
    %v133 = vadd.f32 %v52, %v132
    %v134 = vpop.f32.mrf.mxu0
    %135 = vdwg.mxu0
    %v136 = vtanh.pop %v128
    %v137 = vtanh.pop %v133
    %v138 = vxor.u32 %v128, 2147483648
    %v139 = vxor.u32 %v133, 2147483648
    %v140 = vmul.f32 %v138, 1.442695
    %v141 = vpow.pop %v140
    %v142 = vmul.f32 %v139, 1.442695
    %v143 = vpow.pop %v142
    %v144 = vadd.f32 %v141, 1.0
    %v145 = vadd.f32 %v143, 1.0
    %v146 = vrcp.pop %v144
    %v147 = vmul.f32 1.0, %v146
    %v148 = vrcp.pop %v145
    %v149 = vmul.f32 1.0, %v148
    %152 = vrot.lane.b32.xlu0 %v147, 96
    %v153 = vpop.permute.xlu0 %152
    %154 = vrot.lane.b32.xlu0 %v149, 96
    %v155 = vpop.permute.xlu0 %154
    %v158 = vmul.f32 %v136, %v153
    %v159 = vmul.f32 %v137, %v155
    %vm160 = vcmask 261120
    %161 = vst.msk [vmem:[#allocation7] sm:$0xff] %vm160, %v158
    %162 = vst.msk [vmem:[#allocation7 + $0x8] sm:$0xff] %vm160, %v159
    // Predicated region
    $region22: #{tpu_custom_call.1} parent=1 // pred_check
      _
    $region23: #{tpu_custom_call.1} parent=1 // pred_check_branch
      %164 = sbr.rel (0) target = $region25
    $region24: #{tpu_custom_call.1} parent=1 // pred_region
      %s166 = ssub.s32 256, 256
      %167 = vsyncadd [#allocation4], %s166
      %s168 = sshll.u32 [#allocation7], 4
      %s169 = int_to_ptr.vmem [resolvable:$true] %s168
      %174 = dma.vmem_to_hbm [thread:$0]  %s169, 256, %s3, [#allocation4], 128, 128, 8
    $region25: #{tpu_custom_call.1} parent=1 // pred_fallthru
      _
    // Predicated region
    $region26: #{tpu_custom_call.1} parent=1 // pred_check
      _
    $region27: #{tpu_custom_call.1} parent=1 // pred_check_branch
      %176 = sbr.rel (0) target = $region29
    $region28: #{tpu_custom_call.1} parent=1 // pred_region
      %177 = dma.done [#allocation4], 256
    $region29: #{tpu_custom_call.1} parent=1 // pred_fallthru
      _
    %178 = vsyncpa [#allocation3], 1
    %179 = vsyncpa [#allocation6], 1
    %180 = vsyncpa [#allocation4], 1

</llo_original>
